<compile_context>
chip_gen: v6e
topology: v6e:2x2x1
jax: 0.10.0
libtpu: 0.0.40
codegen_flags: <defaults>
</compile_context>

<pallas_src>
import jax
import jax.numpy as jnp
from jax.experimental import pallas as pl
from jax.experimental.pallas import tpu as pltpu


def _round_up(x, m):
    return ((x + m - 1) // m) * m


def _cdiv(a, b):
    return -(-a // b)


def _vmem_budget_bytes():
    """Per-kernel VMEM budget safe on v5e/v6e (128 MiB phys) and v7x (64 MiB phys)."""
    phys = 64 << 20  # conservative fallback = v7x per-TC physical VMEM
    try:
        phys = int(pltpu.get_tpu_info().vmem_capacity_bytes)
    except Exception:
        pass
    return min(48 << 20, (phys * 3) // 4)


def _projection_head_kernel(x_ref, w1_ref, b1_ref, w2_ref, b2_ref, o_ref):
    # x_ref: (C_in, tn) channel-major tile -- channels on sublanes, voxels on lanes.
    x = x_ref[...].astype(jnp.float32)

    # 1x1x1 Conv3d #1 with eval-mode BN folded into (w1, b1), then ReLU.
    h = jnp.dot(w1_ref[...], x, preferred_element_type=jnp.float32) + b1_ref[...]
    h = jnp.maximum(h, 0.0)

    # 1x1x1 Conv3d #2.
    y = jnp.dot(w2_ref[...], h, preferred_element_type=jnp.float32) + b2_ref[...]

    # L2 normalize across the channel (sublane) axis per voxel.
    # rsqrt(max(sq, 1e-24)) == 1 / max(sqrt(sq), 1e-12)  (F.normalize eps semantics).
    sq = jnp.sum(y * y, axis=0, keepdims=True)          # (1, tn)
    inv = jax.lax.rsqrt(jnp.maximum(sq, 1e-24))
    o_ref[...] = (y * inv).astype(o_ref.dtype)


def projection_head_pallas(x, params, *, tn_target=16384, out_dtype=None):
    """x: (N, C_in, D, H, W).  Returns (N, P, D, H, W) in out_dtype (default x.dtype)."""
    w1, b1, gamma, beta, rmean, rvar, w2, b2 = (
        params["w1"], params["b1"], params["gamma"], params["beta"],
        params["rmean"], params["rvar"], params["w2"], params["b2"])

    N, C_in, D, H, W = x.shape
    P = w2.shape[0]
    DHW = D * H * W
    out_dtype = x.dtype if out_dtype is None else jnp.dtype(out_dtype)
    out_isize = jnp.dtype(out_dtype).itemsize

    # ---- Lane-tile selection from a per-generation VMEM budget --------------
    budget = _vmem_budget_bytes()
    # Per-lane bytes: double-buffered x tile + double-buffered out tile + live
    # f32 intermediates (h, y, scaled y) inside the body.
    bytes_per_lane = 4 * (2 * C_in) + out_isize * (2 * P) + 4 * (C_in + 2 * P + 8)
    weight_bytes = 2 * 4 * (C_in * C_in + C_in + P * C_in + P)  # double-buffered
    margin = 2 << 20
    tn_cap = max(128, ((budget - weight_bytes - margin) // bytes_per_lane) // 128 * 128)
    tn_cap = min(tn_cap, _round_up(max(tn_target, 128), 128))
    if N == 1:
        # Keep >=2 blocks along the (parallel) spatial axis so both v7x TCs get work.
        tn_cap = min(tn_cap, max(128, _round_up(_cdiv(DHW, 2), 128)))
    tn = min(tn_cap, _round_up(DHW, 128))
    if tn >= DHW:
        tn = DHW            # full-extent block: always legal, no ragged block at all
    nj = _cdiv(DHW, tn)     # ragged last block (if any) handled by Pallas masking

    # Free reshape (memory layout unchanged).  NO padding, NO post-slice.
    x3 = x.reshape(N, C_in, DHW)

    # Fold eval-mode BN (scale/shift) into conv1 weight/bias.
    bn_scale = gamma / jnp.sqrt(rvar + 1e-5)            # (C_in,)
    bn_bias = beta - rmean * bn_scale                   # (C_in,)
    w1f = w1 * bn_scale[:, None]                        # (C_in, C_in), rows = out ch
    b1f = (b1 * bn_scale + bn_bias).reshape(C_in, 1)    # broadcast over lanes
    b2r = b2.reshape(P, 1)

    wmap = lambda n, j: (0, 0)

    cost = pl.CostEstimate(
        flops=int(2 * N * DHW * C_in * (C_in + P) + 4 * N * DHW * P),
        transcendentals=int(N * DHW),
        bytes_accessed=int(N * DHW * (C_in * 4 + P * out_isize)
                           + 4 * (C_in * C_in + C_in + P * C_in + P)),
    )

    out3 = pl.pallas_call(
        _projection_head_kernel,
        out_shape=jax.ShapeDtypeStruct((N, P, DHW), out_dtype),
        grid_spec=pltpu.PrefetchScalarGridSpec(
            num_scalar_prefetch=0,
            grid=(N, nj),
            in_specs=[
                pl.BlockSpec((None, C_in, tn), lambda n, j: (n, 0, j)),  # x tile
                pl.BlockSpec((C_in, C_in), wmap),                        # w1 (BN folded)
                pl.BlockSpec((C_in, 1), wmap),                           # b1 (BN folded)
                pl.BlockSpec((P, C_in), wmap),                           # w2
                pl.BlockSpec((P, 1), wmap),                              # b2
            ],
            out_specs=pl.BlockSpec((None, P, tn), lambda n, j: (n, 0, j)),
        ),
        compiler_params=pltpu.CompilerParams(
            dimension_semantics=("parallel", "parallel"),
            vmem_limit_bytes=int(budget),
        ),
        cost_estimate=cost,
    )(x3, w1f, b1f, w2, b2r)

    return out3.reshape(N, P, D, H, W)


def projection_head_ref(x, params):
    """Pure-JAX reference (same semantics, eval-mode BN)."""
    w1, b1, gamma, beta, rmean, rvar, w2, b2 = (
        params["w1"], params["b1"], params["gamma"], params["beta"],
        params["rmean"], params["rvar"], params["w2"], params["b2"])
    h = jnp.einsum('ncdhw,oc->nodhw', x, w1) + b1[None, :, None, None, None]
    scale = gamma / jnp.sqrt(rvar + 1e-5)
    bias = beta - rmean * scale
    h = h * scale[None, :, None, None, None] + bias[None, :, None, None, None]
    h = jnp.maximum(h, 0.0)
    y = jnp.einsum('ncdhw,oc->nodhw', h, w2) + b2[None, :, None, None, None]
    norm = jnp.maximum(jnp.sqrt(jnp.sum(y * y, axis=1, keepdims=True)), 1e-12)
    return y / norm


def make_params(key, dim_in, proj_dim):
    ks = jax.random.split(key, 8)
    return {
        "w1": jax.random.normal(ks[0], (dim_in, dim_in), jnp.float32) * 0.2,
        "b1": jax.random.normal(ks[1], (dim_in,), jnp.float32) * 0.1,
        "gamma": jnp.ones((dim_in,), jnp.float32)
                 + 0.1 * jax.random.normal(ks[2], (dim_in,), jnp.float32),
        "beta": 0.1 * jax.random.normal(ks[3], (dim_in,), jnp.float32),
        "rmean": 0.1 * jax.random.normal(ks[4], (dim_in,), jnp.float32),
        "rvar": jnp.abs(jax.random.normal(ks[5], (dim_in,), jnp.float32)) + 0.5,
        "w2": jax.random.normal(ks[6], (proj_dim, dim_in), jnp.float32) * 0.2,
        "b2": jax.random.normal(ks[7], (proj_dim,), jnp.float32) * 0.1,
    }


if __name__ == "__main__":
    key = jax.random.PRNGKey(0)
    k_x, k_p, k_x2 = jax.random.split(key, 3)

    # Small shapes: batch=2, channels(dim_in)=8, spatial D=4, H=8, W=8, proj_dim=32
    N, C_in, D, H, W = 2, 8, 4, 8, 8
    proj_dim = 32

    x = jax.random.normal(k_x, (N, C_in, D, H, W), jnp.float32)
    params = make_params(k_p, C_in, proj_dim)

    out = jax.block_until_ready(projection_head_pallas(x, params))
    ref = projection_head_ref(x, params)
    assert out.shape == (N, proj_dim, D, H, W)
    assert jnp.allclose(out, ref, atol=1e-5, rtol=1e-5), "mismatch vs reference"

    # Ragged spatial extent + single batch: exercises the ceil-div grid (masked
    # last block, no jnp.pad / post-slice) and the N==1 two-block split (v7x TCs).
    x2 = jax.random.normal(k_x2, (1, C_in, 3, 7, 10), jnp.float32)
    out2 = jax.block_until_ready(projection_head_pallas(x2, params))
    ref2 = projection_head_ref(x2, params)
    assert out2.shape == (1, proj_dim, 3, 7, 10)
    assert jnp.allclose(out2, ref2, atol=1e-5, rtol=1e-5), "mismatch vs reference (ragged)"

    print("KERNEL_OK")
</pallas_src>

<mosaic_0001>
module attributes {stable_mosaic.version = 11 : i64} {
  func.func @_projection_head_kernel(%arg0: i32, %arg1: i32, %arg2: memref<1x8x256xf32, #tpu.memory_space<vmem>>, %arg3: memref<8x8xf32, #tpu.memory_space<vmem>>, %arg4: memref<8x1xf32, #tpu.memory_space<vmem>>, %arg5: memref<32x8xf32, #tpu.memory_space<vmem>>, %arg6: memref<32x1xf32, #tpu.memory_space<vmem>>, %arg7: memref<1x32x256xf32, #tpu.memory_space<vmem>>) attributes {dimension_semantics = [#tpu.dimension_semantics<parallel>, #tpu.dimension_semantics<parallel>], iteration_bounds = array<i64: 2, 1>, scalar_prefetch = 0 : i64, scratch_operands = 0 : i64, tpu.core_type = #tpu.core_type<tc>, window_params = [{transform_indices = @transform_0, window_bounds = array<i64: 1, 8, 256>}, {pipeline_mode = #tpu.pipeline_mode<synchronous>, transform_indices = @transform_1, window_bounds = array<i64: 8, 8>}, {pipeline_mode = #tpu.pipeline_mode<synchronous>, transform_indices = @transform_2, window_bounds = array<i64: 8, 1>}, {pipeline_mode = #tpu.pipeline_mode<synchronous>, transform_indices = @transform_3, window_bounds = array<i64: 32, 8>}, {pipeline_mode = #tpu.pipeline_mode<synchronous>, transform_indices = @transform_4, window_bounds = array<i64: 32, 1>}, {transform_indices = @transform_5, window_bounds = array<i64: 1, 32, 256>}]} {
    %c0 = arith.constant 0 : index
    %c0_0 = arith.constant 0 : index
    %c0_1 = arith.constant 0 : index
    %0 = vector.load %arg2[%c0, %c0_0, %c0_1] : memref<1x8x256xf32, #tpu.memory_space<vmem>>, vector<1x8x256xf32>
    %1 = vector.shape_cast %0 : vector<1x8x256xf32> to vector<8x256xf32>
    %c0_2 = arith.constant 0 : index
    %c0_3 = arith.constant 0 : index
    %2 = vector.load %arg3[%c0_2, %c0_3] : memref<8x8xf32, #tpu.memory_space<vmem>>, vector<8x8xf32>
    %cst = arith.constant dense<0.000000e+00> : vector<8x256xf32>
    %3 = tpu.matmul %2, %1, %cst {dimension_numbers = #tpu.dot_dimension_numbers<[1], [0], [0], [1], [0, 0, 1, 1], [], []>} : vector<8x8xf32>, vector<8x256xf32>, vector<8x256xf32> -> vector<8x256xf32>
    %c0_4 = arith.constant 0 : index
    %c0_5 = arith.constant 0 : index
    %4 = vector.load %arg4[%c0_4, %c0_5] : memref<8x1xf32, #tpu.memory_space<vmem>>, vector<8x1xf32>
    %5 = vector.broadcast %4 : vector<8x1xf32> to vector<8x256xf32>
    %6 = arith.addf %3, %5 : vector<8x256xf32>
    %cst_6 = arith.constant 0.000000e+00 : f32
    %7 = vector.broadcast %cst_6 : f32 to vector<8x256xf32>
    %8 = arith.maximumf %6, %7 : vector<8x256xf32>
    %c0_7 = arith.constant 0 : index
    %c0_8 = arith.constant 0 : index
    %9 = vector.load %arg5[%c0_7, %c0_8] : memref<32x8xf32, #tpu.memory_space<vmem>>, vector<32x8xf32>
    %cst_9 = arith.constant dense<0.000000e+00> : vector<32x256xf32>
    %10 = tpu.matmul %9, %8, %cst_9 {dimension_numbers = #tpu.dot_dimension_numbers<[1], [0], [0], [1], [0, 0, 1, 1], [], []>} : vector<32x8xf32>, vector<8x256xf32>, vector<32x256xf32> -> vector<32x256xf32>
    %c0_10 = arith.constant 0 : index
    %c0_11 = arith.constant 0 : index
    %11 = vector.load %arg6[%c0_10, %c0_11] : memref<32x1xf32, #tpu.memory_space<vmem>>, vector<32x1xf32>
    %12 = vector.broadcast %11 : vector<32x1xf32> to vector<32x256xf32>
    %13 = arith.addf %10, %12 : vector<32x256xf32>
    %14 = arith.mulf %13, %13 : vector<32x256xf32>
    %cst_12 = arith.constant dense<0.000000e+00> : vector<256xf32>
    %15 = vector.multi_reduction <add>, %14, %cst_12 [0] : vector<32x256xf32> to vector<256xf32>
    %16 = vector.shape_cast %15 : vector<256xf32> to vector<1x256xf32>
    %cst_13 = arith.constant 1.000000e-24 : f32
    %17 = vector.broadcast %cst_13 : f32 to vector<1x256xf32>
    %18 = arith.maximumf %16, %17 : vector<1x256xf32>
    %19 = math.rsqrt %18 : vector<1x256xf32>
    %20 = vector.broadcast %19 : vector<1x256xf32> to vector<32x256xf32>
    %21 = arith.mulf %13, %20 : vector<32x256xf32>
    %c0_14 = arith.constant 0 : index
    %c0_15 = arith.constant 0 : index
    %c0_16 = arith.constant 0 : index
    %22 = vector.load %arg7[%c0_14, %c0_15, %c0_16] : memref<1x32x256xf32, #tpu.memory_space<vmem>>, vector<1x32x256xf32>
    %23 = vector.shape_cast %22 : vector<1x32x256xf32> to vector<32x256xf32>
    %24 = vector.shape_cast %21 : vector<32x256xf32> to vector<1x32x256xf32>
    tpu.vector_store %arg7[%c0_14, %c0_15, %c0_16], %24 {strides = array<i32>} : memref<1x32x256xf32, #tpu.memory_space<vmem>>, vector<1x32x256xf32>,
    return
  }
  func.func @transform_0(%arg0: i32, %arg1: i32) -> (i32, i32, i32) {
    %c0_i32 = arith.constant 0 : i32
    %c0_i32_0 = arith.constant 0 : i32
    return %arg0, %c0_i32, %arg1 : i32, i32, i32
  }
  func.func @transform_1(%arg0: i32, %arg1: i32) -> (i32, i32) {
    %c0_i32 = arith.constant 0 : i32
    %c0_i32_0 = arith.constant 0 : i32
    %c0_i32_1 = arith.constant 0 : i32
    return %c0_i32, %c0_i32_0 : i32, i32
  }
  func.func @transform_2(%arg0: i32, %arg1: i32) -> (i32, i32) {
    %c0_i32 = arith.constant 0 : i32
    %c0_i32_0 = arith.constant 0 : i32
    %c0_i32_1 = arith.constant 0 : i32
    return %c0_i32, %c0_i32_0 : i32, i32
  }
  func.func @transform_3(%arg0: i32, %arg1: i32) -> (i32, i32) {
    %c0_i32 = arith.constant 0 : i32
    %c0_i32_0 = arith.constant 0 : i32
    %c0_i32_1 = arith.constant 0 : i32
    return %c0_i32, %c0_i32_0 : i32, i32
  }
  func.func @transform_4(%arg0: i32, %arg1: i32) -> (i32, i32) {
    %c0_i32 = arith.constant 0 : i32
    %c0_i32_0 = arith.constant 0 : i32
    %c0_i32_1 = arith.constant 0 : i32
    return %c0_i32, %c0_i32_0 : i32, i32
  }
  func.func @transform_5(%arg0: i32, %arg1: i32) -> (i32, i32, i32) {
    %c0_i32 = arith.constant 0 : i32
    %c0_i32_0 = arith.constant 0 : i32
    return %arg0, %c0_i32, %arg1 : i32, i32, i32
  }
}

</mosaic_0001>

<llo_original>
// kernel: tpu_custom_call.1
$region0: #{tpu_custom_call.1}
  #allocation0 [shape = 'u32[]', space=smem, size = 0x4, offset = 0x4, fixed_abs, tag = 'smem constant byte address 0x4 - core index']
  #allocation1 [shape = 'u32[144,128]{1,0:T(1,128)}', space=vmem, size = 0x12000, scoped, tag = 'internal scratch']
  %s0 = inlined_call_operand.vmem [shape: f32[2,8,256], index: 0, kind: input, shape index: {}]
  %s1 = inlined_call_operand.vmem [shape: f32[8,8], index: 1, kind: input, shape index: {}]
  %s2 = inlined_call_operand.vmem [shape: f32[8,1], index: 2, kind: input, shape index: {}]
  %s3 = inlined_call_operand.vmem [shape: f32[32,8], index: 3, kind: input, shape index: {}]
  %s4 = inlined_call_operand.vmem [shape: f32[32,1], index: 4, kind: input, shape index: {}]
  %s5 = inlined_call_operand.hbm [shape: f32[2,32,256], index: 5, kind: output, shape index: {}]
  %s6 = sld [smem:[#allocation0]]
  $region53: #{tpu_custom_call.1} parent=0
    _
  %s8 = ssub.s32 1, %s6
  %s9 = scalar_select 0, %s8, %s6
  $region1: #{tpu_custom_call.1} parent=0
    #allocation2 [shape = 'u8[65536]{0}', space=vmem, size = 0x10000, scoped, tag = 'output window, operand 0']
    #allocation3 [shape = 's32[2]{0}', space=sflag, size = 0x8, scoped, tag = 'scoped memory for tpu_custom_call.1']
    %10 = vsyncpa [#allocation3], 0
    %s11 = scalar_lea.sflag [#allocation3], 1
    %12 = vsyncpa %s11, 0
    loop: start=0, step=1, limit=4
    $region2: #{tpu_custom_call.1} parent=1 // loop_pre_header
      _
    $region3: #{tpu_custom_call.1} parent=1 // loop_header
      %s14 = sphi 0, %s18
      %p15 = scmp.ge.s32.totalorder %s14, 4
      %s21 = sphi 0, %s33
      %s22 = sphi 0, %s29
      %s23 = sphi 0, %s21
      %s24 = sphi 0, %s22
      %s25 = sphi 0, %s23
      %s26 = sphi 0, %s24
      %s38 = sphi 0, %s40
      %s41 = sphi 0, %s38
      %s42 = sphi 0, %s41
      %s58 = sphi 0, %s42
      %s62 = sphi 0, %s62
      %s64 = sphi 0, %s62
      %s65 = sphi 0, %s64
      %s79 = sphi 0, %s65
      %s83 = sphi 0, %s83
      %s85 = sphi 0, %s83
      %s86 = sphi 0, %s85
      %s100 = sphi 0, %s86
      %s104 = sphi 0, %s104
      %s106 = sphi 0, %s104
      %s107 = sphi 0, %s106
      %s121 = sphi 0, %s107
      %s125 = sphi 0, %s125
      %s127 = sphi 0, %s125
      %s128 = sphi 0, %s127
      %s142 = sphi 0, %s128
      %s150 = sphi 0, %s152
      %s153 = sphi 0, %s150
      %s154 = sphi 0, %s153
      %s170 = sphi 0, %s154
    $region4: #{tpu_custom_call.1} parent=1 // loop_header_branch
      %17 = sbr.rel (%p15) target = $region8
    $region5: #{tpu_custom_call.1} parent=1 // loop_body
      %s19 = ssub.s32 %s14, 1
      %s20 = ssub.s32 %s14, 2
      %s27 = sadd.s32 1, %s22
      %p28 = scmp.ge.s32.totalorder %s27, 1
      %s29 = scalar_select %p28, 0, %s27
      %s30 = sadd.s32 1, %s21
      %s31 = scalar_select %p28, %s30, %s21
      %p32 = scmp.ge.s32.totalorder %s31, 2
      %s33 = scalar_select %p32, 0, %s31
      %s34 = ssub.s32 %s21, %s33
      %s35 = ssub.s32 %s22, %s29
      %s36 = sor.u32 %s34, %s35
      %p37 = scmp.eq.s32.totalorder %s36, 0
      %s39 = sadd.s32 %s38, 1
      %s40 = scalar_select %p37, %s38, %s39
      %p43 = pneg %p37
      %p44 = scmp.eq.s32.totalorder %s14, 1
      %p45 = por %p43, %p44
      %p46 = scmp.ne.s32.totalorder %s38, %s41
      %p47 = scmp.eq.s32.totalorder %s14, 0
      %p48 = por %p46, %p47
      %p49 = scmp.ne.s32.totalorder %s38, %s41
      %p50 = scmp.eq.s32.totalorder %s19, 1
      %p51 = por %p49, %p50
      %p52 = scmp.ne.s32.totalorder %s41, %s42
      %p53 = scmp.eq.s32.totalorder %s19, 0
      %p54 = por %p52, %p53
      %p55 = scmp.ne.s32.totalorder %s41, %s42
      %p56 = scmp.eq.s32.totalorder %s20, 1
      %p57 = por %p55, %p56
      %p59 = scmp.ne.s32.totalorder %s42, %s58
      %p60 = scmp.eq.s32.totalorder %s20, 0
      %p61 = por %p59, %p60
      %s63 = sadd.s32 %s62, 1
      %p66 = scmp.eq.s32.totalorder %s14, 1
      %p67 = scmp.ne.s32.totalorder %s62, %s64
      %p68 = scmp.eq.s32.totalorder %s14, 0
      %p69 = por %p67, %p68
      %p70 = scmp.ne.s32.totalorder %s62, %s64
      %p71 = scmp.eq.s32.totalorder %s19, 1
      %p72 = por %p70, %p71
      %p73 = scmp.ne.s32.totalorder %s64, %s65
      %p74 = scmp.eq.s32.totalorder %s19, 0
      %p75 = por %p73, %p74
      %p76 = scmp.ne.s32.totalorder %s64, %s65
      %p77 = scmp.eq.s32.totalorder %s20, 1
      %p78 = por %p76, %p77
      %p80 = scmp.ne.s32.totalorder %s65, %s79
      %p81 = scmp.eq.s32.totalorder %s20, 0
      %p82 = por %p80, %p81
      %s84 = sadd.s32 %s83, 1
      %p87 = scmp.eq.s32.totalorder %s14, 1
      %p88 = scmp.ne.s32.totalorder %s83, %s85
      %p89 = scmp.eq.s32.totalorder %s14, 0
      %p90 = por %p88, %p89
      %p91 = scmp.ne.s32.totalorder %s83, %s85
      %p92 = scmp.eq.s32.totalorder %s19, 1
      %p93 = por %p91, %p92
      %p94 = scmp.ne.s32.totalorder %s85, %s86
      %p95 = scmp.eq.s32.totalorder %s19, 0
      %p96 = por %p94, %p95
      %p97 = scmp.ne.s32.totalorder %s85, %s86
      %p98 = scmp.eq.s32.totalorder %s20, 1
      %p99 = por %p97, %p98
      %p101 = scmp.ne.s32.totalorder %s86, %s100
      %p102 = scmp.eq.s32.totalorder %s20, 0
      %p103 = por %p101, %p102
      %s105 = sadd.s32 %s104, 1
      %p108 = scmp.eq.s32.totalorder %s14, 1
      %p109 = scmp.ne.s32.totalorder %s104, %s106
      %p110 = scmp.eq.s32.totalorder %s14, 0
      %p111 = por %p109, %p110
      %p112 = scmp.ne.s32.totalorder %s104, %s106
      %p113 = scmp.eq.s32.totalorder %s19, 1
      %p114 = por %p112, %p113
      %p115 = scmp.ne.s32.totalorder %s106, %s107
      %p116 = scmp.eq.s32.totalorder %s19, 0
      %p117 = por %p115, %p116
      %p118 = scmp.ne.s32.totalorder %s106, %s107
      %p119 = scmp.eq.s32.totalorder %s20, 1
      %p120 = por %p118, %p119
      %p122 = scmp.ne.s32.totalorder %s107, %s121
      %p123 = scmp.eq.s32.totalorder %s20, 0
      %p124 = por %p122, %p123
      %s126 = sadd.s32 %s125, 1
      %p129 = scmp.eq.s32.totalorder %s14, 1
      %p130 = scmp.ne.s32.totalorder %s125, %s127
      %p131 = scmp.eq.s32.totalorder %s14, 0
      %p132 = por %p130, %p131
      %p133 = scmp.ne.s32.totalorder %s125, %s127
      %p134 = scmp.eq.s32.totalorder %s19, 1
      %p135 = por %p133, %p134
      %p136 = scmp.ne.s32.totalorder %s127, %s128
      %p137 = scmp.eq.s32.totalorder %s19, 0
      %p138 = por %p136, %p137
      %p139 = scmp.ne.s32.totalorder %s127, %s128
      %p140 = scmp.eq.s32.totalorder %s20, 1
      %p141 = por %p139, %p140
      %p143 = scmp.ne.s32.totalorder %s128, %s142
      %p144 = scmp.eq.s32.totalorder %s20, 0
      %p145 = por %p143, %p144
      %s146 = ssub.s32 %s21, %s33
      %s147 = ssub.s32 %s22, %s29
      %s148 = sor.u32 %s146, %s147
      %p149 = scmp.eq.s32.totalorder %s148, 0
      %s151 = sadd.s32 %s150, 1
      %s152 = scalar_select %p149, %s150, %s151
      %p155 = pneg %p149
      %p156 = scmp.eq.s32.totalorder %s14, 1
      %p157 = por %p155, %p156
      %p158 = scmp.ne.s32.totalorder %s150, %s153
      %p159 = scmp.eq.s32.totalorder %s14, 0
      %p160 = por %p158, %p159
      %p161 = scmp.ne.s32.totalorder %s150, %s153
      %p162 = scmp.eq.s32.totalorder %s19, 1
      %p163 = por %p161, %p162
      %p164 = scmp.ne.s32.totalorder %s153, %s154
      %p165 = scmp.eq.s32.totalorder %s19, 0
      %p166 = por %p164, %p165
      %p167 = scmp.ne.s32.totalorder %s153, %s154
      %p168 = scmp.eq.s32.totalorder %s20, 1
      %p169 = por %p167, %p168
      %p171 = scmp.ne.s32.totalorder %s154, %s170
      %p172 = scmp.eq.s32.totalorder %s20, 0
      %p173 = por %p171, %p172
      %p174 = scmp.le.s32.totalorder 1, %s14
      %p175 = scmp.lt.s32.totalorder %s14, 3
      %p176 = pnand %p174, %p175
      %p177 = pneg %p176
      // Predicated region
      $region9: #{tpu_custom_call.1} parent=5 // pred_check
        _
      $region10: #{tpu_custom_call.1} parent=5 // pred_check_branch
        %179 = sbr.rel (%p176) target = $region12
      $region11: #{tpu_custom_call.1} parent=5 // pred_region
        %s180 = ssub.s32 %s14, 1
        // Predicated region
        $region13: #{tpu_custom_call.1} parent=11 // pred_check
          %p181 = pneg %p75
        $region14: #{tpu_custom_call.1} parent=11 // pred_check_branch
          %183 = sbr.rel (%p181) target = $region16
        $region15: #{tpu_custom_call.1} parent=11 // pred_region
          _
        $region16: #{tpu_custom_call.1} parent=11 // pred_fallthru
          _
        // Predicated region
        $region17: #{tpu_custom_call.1} parent=11 // pred_check
          %p184 = pneg %p96
        $region18: #{tpu_custom_call.1} parent=11 // pred_check_branch
          %186 = sbr.rel (%p184) target = $region20
        $region19: #{tpu_custom_call.1} parent=11 // pred_region
          _
        $region20: #{tpu_custom_call.1} parent=11 // pred_fallthru
          _
        // Predicated region
        $region21: #{tpu_custom_call.1} parent=11 // pred_check
          %p187 = pneg %p117
        $region22: #{tpu_custom_call.1} parent=11 // pred_check_branch
          %189 = sbr.rel (%p187) target = $region24
        $region23: #{tpu_custom_call.1} parent=11 // pred_region
          _
        $region24: #{tpu_custom_call.1} parent=11 // pred_fallthru
          _
        // Predicated region
        $region25: #{tpu_custom_call.1} parent=11 // pred_check
          %p190 = pneg %p138
        $region26: #{tpu_custom_call.1} parent=11 // pred_check_branch
          %192 = sbr.rel (%p190) target = $region28
        $region27: #{tpu_custom_call.1} parent=11 // pred_region
          _
        $region28: #{tpu_custom_call.1} parent=11 // pred_fallthru
          _
      $region12: #{tpu_custom_call.1} parent=5 // pred_fallthru
        _
      %p193 = scmp.lt.s32.totalorder %s14, 2
      // Predicated region
      $region29: #{tpu_custom_call.1} parent=5 // pred_check
        %p194 = pneg %p193
      $region30: #{tpu_custom_call.1} parent=5 // pred_check_branch
        %196 = sbr.rel (%p194) target = $region32
      $region31: #{tpu_custom_call.1} parent=5 // pred_region
        // Predicated region
        $region33: #{tpu_custom_call.1} parent=31 // pred_check
          %p197 = pneg %p48
        $region34: #{tpu_custom_call.1} parent=31 // pred_check_branch
          %199 = sbr.rel (%p197) target = $region36
        $region35: #{tpu_custom_call.1} parent=31 // pred_region
          %s200 = smul.u32 2, %s22
          %p201 = scmp.lt.s32.totalorder %s21, 1
          %s202 = scalar_select %p201, %s21, 1
          %p203 = scmp.lt.s32.totalorder %s200, 1
          %s204 = scalar_select %p203, %s200, 1
          %s205 = smul.addr %s202, 2
          %s206 = sadd.s32 %s204, %s205
          %s207 = smul.addr %s206, 8
          %s208 = scalar_lea.vmem %s0, %s207
          %s209 = smul.u32 2, %s22
        $region36: #{tpu_custom_call.1} parent=31 // pred_fallthru
          _
      $region32: #{tpu_custom_call.1} parent=5 // pred_fallthru
        _
      %p210 = scmp.le.s32.totalorder 1, %s14
      %p211 = scmp.lt.s32.totalorder %s14, 3
      %p212 = pnand %p210, %p211
      %p213 = pneg %p212
      // Predicated region
      $region37: #{tpu_custom_call.1} parent=5 // pred_check
        _
      $region38: #{tpu_custom_call.1} parent=5 // pred_check_branch
        %215 = sbr.rel (%p212) target = $region40
      $region39: #{tpu_custom_call.1} parent=5 // pred_region
        %s216 = ssub.s32 %s14, 1
        %s217 = smul.u32 2, %s24
        %p218 = scmp.lt.s32.totalorder %s23, 1
        %s219 = scalar_select %p218, %s23, 1
        %p220 = scmp.lt.s32.totalorder %s217, 1
        %s221 = scalar_select %p220, %s217, 1
        %s222 = smul.addr %s219, 2
        %s223 = sadd.s32 %s221, %s222
        %s224 = smul.addr %s223, 8
        %s225 = scalar_lea.vmem %s0, %s224
        %p226 = pneg %p54
        %p227 = pneg %p51
        %p228 = pneg %p75
        %p229 = pneg %p72
        %p230 = pneg %p96
        %p231 = pneg %p93
        %p232 = pneg %p117
        %p233 = pneg %p114
        %p234 = pneg %p138
        %p235 = pneg %p135
        %p236 = pneg %p166
        %p237 = pneg %p163
        %s238 = sand.u32 %s153, 1
        %s239 = scalar_lea.sflag [#allocation3], %s238
        %s240 = sand.u32 %s153, 1
        %s241 = smul.addr %s240, 64
        %s242 = scalar_lea.vmem [#allocation2], %s241
        %s243 = smul.u32 2, %s24
        %p244 = scmp.lt.s32.totalorder %s23, 1
        %s245 = scalar_select %p244, %s23, 1
        %p246 = scmp.lt.s32.totalorder %s243, 1
        %s247 = scalar_select %p246, %s243, 1
        %s248 = smul.addr %s245, 2
        %s249 = sadd.s32 %s247, %s248
        %s250 = smul.addr %s249, 8
        %s251 = scalar_lea.vmem %s0, %s250
        %s252 = smul.u32 2, %s24
        %s253 = smul.u32 2, %s24
        %v254 = vld [vmem:[%s251] sm:$0xff]
        %v255 = vld [vmem:[%s251 + $0x8] sm:$0xff]
        %v256 = vld [vmem:[%s1] sm:$0xff]
        %v257 = vld [vmem:[%s2] sm:$0xff]
        %259 = vset.pattern.permute.xlu0 0
        %260 = vperm.xlu0 %259, %v257
        %v261 = vpop.permute.xlu0 %260
        %vm263 = vcmask 64512
        %v265 = vsel %vm263, %v256, 0
        %267 = vmatprep.subr.mxu0 0.0
        %268 = vmatpush1.msra.mxu0 0.0
        %269 = vmatprep.subr.mxu0 0.0
        %270 = vmatpush1.msra.mxu0 0.0
        %271 = vmatprep.subr.mxu0 0.0
        %272 = vmatpush1.msra.mxu0 0.0
        %273 = vmatprep.subr.mxu0 0.0
        %274 = vmatpush1.msra.mxu0 0.0
        %275 = vmatprep.subr.mxu0 0.0
        %276 = vmatpush1.msra.mxu0 0.0
        %277 = vmatprep.subr.mxu0 0.0
        %278 = vmatpush1.msra.mxu0 0.0
        %279 = vmatprep.subr.mxu0 0.0
        %280 = vmatpush1.msra.mxu0 0.0
        %281 = vmatprep.subr.mxu0 0.0
        %282 = vmatpush1.msra.mxu0 0.0
        %283 = vmatprep.subr.mxu0 0.0
        %284 = vmatpush1.msra.mxu0 0.0
        %285 = vmatprep.subr.mxu0 0.0
        %286 = vmatpush1.msra.mxu0 0.0
        %287 = vmatprep.subr.mxu0 0.0
        %288 = vmatpush1.msra.mxu0 0.0
        %289 = vmatprep.subr.mxu0 0.0
        %290 = vmatpush1.msra.mxu0 0.0
        %291 = vmatprep.subr.mxu0 0.0
        %292 = vmatpush1.msra.mxu0 0.0
        %293 = vmatprep.subr.mxu0 0.0
        %294 = vmatpush1.msra.mxu0 0.0
        %295 = vmatprep.subr.mxu0 0.0
        %296 = vmatpush1.msra.mxu0 0.0
        %297 = vmatprep.subr.mxu0 %v255
        %298 = vmatpush1.msra.mxu0 %v254
        %299 = vmatprep.subr.mxu0 0.0
        %300 = vmatpush2.msra.mxu0 0.0
        %301 = vmatprep.subr.mxu0 0.0
        %302 = vmatpush2.msra.mxu0 0.0
        %303 = vmatprep.subr.mxu0 0.0
        %304 = vmatpush2.msra.mxu0 0.0
        %305 = vmatprep.subr.mxu0 0.0
        %306 = vmatpush2.msra.mxu0 0.0
        %307 = vmatprep.subr.mxu0 0.0
        %308 = vmatpush2.msra.mxu0 0.0
        %309 = vmatprep.subr.mxu0 0.0
        %310 = vmatpush2.msra.mxu0 0.0
        %311 = vmatprep.subr.mxu0 0.0
        %312 = vmatpush2.msra.mxu0 0.0
        %313 = vmatprep.subr.mxu0 0.0
        %314 = vmatpush2.msra.mxu0 0.0
        %315 = vmatprep.subr.mxu0 0.0
        %316 = vmatpush2.msra.mxu0 0.0
        %317 = vmatprep.subr.mxu0 0.0
        %318 = vmatpush2.msra.mxu0 0.0
        %319 = vmatprep.subr.mxu0 0.0
        %320 = vmatpush2.msra.mxu0 0.0
        %321 = vmatprep.subr.mxu0 0.0
        %322 = vmatpush2.msra.mxu0 0.0
        %323 = vmatprep.subr.mxu0 0.0
        %324 = vmatpush2.msra.mxu0 0.0
        %325 = vmatprep.subr.mxu0 0.0
        %326 = vmatpush2.msra.mxu0 0.0
        %327 = vmatprep.subr.mxu0 0.0
        %328 = vmatpush2.msra.mxu0 0.0
        %329 = vmatprep.subr.mxu0 0.0
        %330 = vmatpush2.msra.mxu0 0.0
        %331 = vmatprep.mubr.f32.mxu0 0.0
        %332 = vmatmul.mubr.f32.gmra.mxu0 %v265
        %v333 = vpop.f32.mrf.mxu0
        %v334 = vadd.f32 %v261, %v333
        %v335 = vpop.f32.mrf.mxu0
        %v336 = vadd.f32 %v261, %v335
        %337 = vdwg.mxu0
        %v338 = vmax.f32 %v334, 0.0
        %v339 = vmax.f32 %v336, 0.0
        %v340 = vld [vmem:[%s3] sm:$0xff]
        %v341 = vld [vmem:[%s3 + $0x8] sm:$0xff]
        %v342 = vld [vmem:[%s3 + $0x10] sm:$0xff]
        %v343 = vld [vmem:[%s3 + $0x18] sm:$0xff]
        %v344 = vld [vmem:[%s4] sm:$0xff]
        %v345 = vld [vmem:[%s4 + $0x8] sm:$0xff]
        %v346 = vld [vmem:[%s4 + $0x10] sm:$0xff]
        %v347 = vld [vmem:[%s4 + $0x18] sm:$0xff]
        %349 = vset.pattern.permute.xlu0 0
        %350 = vperm.xlu0 %349, %v344
        %v351 = vpop.permute.xlu0 %350
        %354 = vset.pattern.permute.xlu0 0
        %355 = vperm.xlu0 %354, %v345
        %v356 = vpop.permute.xlu0 %355
        %359 = vset.pattern.permute.xlu0 0
        %360 = vperm.xlu0 %359, %v346
        %v361 = vpop.permute.xlu0 %360
        %364 = vset.pattern.permute.xlu0 0
        %365 = vperm.xlu0 %364, %v347
        %v366 = vpop.permute.xlu0 %365
        %v369 = vsel %vm263, %v340, 0
        %v372 = vsel %vm263, %v341, 0
        %v375 = vsel %vm263, %v342, 0
        %v378 = vsel %vm263, %v343, 0
        %380 = vmatprep.subr.mxu0 0.0
        %381 = vmatpush1.msra.mxu0 0.0
        %382 = vmatprep.subr.mxu0 0.0
        %383 = vmatpush1.msra.mxu0 0.0
        %384 = vmatprep.subr.mxu0 0.0
        %385 = vmatpush1.msra.mxu0 0.0
        %386 = vmatprep.subr.mxu0 0.0
        %387 = vmatpush1.msra.mxu0 0.0
        %388 = vmatprep.subr.mxu0 0.0
        %389 = vmatpush1.msra.mxu0 0.0
        %390 = vmatprep.subr.mxu0 0.0
        %391 = vmatpush1.msra.mxu0 0.0
        %392 = vmatprep.subr.mxu0 0.0
        %393 = vmatpush1.msra.mxu0 0.0
        %394 = vmatprep.subr.mxu0 0.0
        %395 = vmatpush1.msra.mxu0 0.0
        %396 = vmatprep.subr.mxu0 0.0
        %397 = vmatpush1.msra.mxu0 0.0
        %398 = vmatprep.subr.mxu0 0.0
        %399 = vmatpush1.msra.mxu0 0.0
        %400 = vmatprep.subr.mxu0 0.0
        %401 = vmatpush1.msra.mxu0 0.0
        %402 = vmatprep.subr.mxu0 0.0
        %403 = vmatpush1.msra.mxu0 0.0
        %404 = vmatprep.subr.mxu0 0.0
        %405 = vmatpush1.msra.mxu0 0.0
        %406 = vmatprep.subr.mxu0 0.0
        %407 = vmatpush1.msra.mxu0 0.0
        %408 = vmatprep.subr.mxu0 0.0
        %409 = vmatpush1.msra.mxu0 0.0
        %410 = vmatprep.subr.mxu0 %v339
        %411 = vmatpush1.msra.mxu0 %v338
        %412 = vmatprep.subr.mxu0 0.0
        %413 = vmatpush2.msra.mxu0 0.0
        %414 = vmatprep.subr.mxu0 0.0
        %415 = vmatpush2.msra.mxu0 0.0
        %416 = vmatprep.subr.mxu0 0.0
        %417 = vmatpush2.msra.mxu0 0.0
        %418 = vmatprep.subr.mxu0 0.0
        %419 = vmatpush2.msra.mxu0 0.0
        %420 = vmatprep.subr.mxu0 0.0
        %421 = vmatpush2.msra.mxu0 0.0
        %422 = vmatprep.subr.mxu0 0.0
        %423 = vmatpush2.msra.mxu0 0.0
        %424 = vmatprep.subr.mxu0 0.0
        %425 = vmatpush2.msra.mxu0 0.0
        %426 = vmatprep.subr.mxu0 0.0
        %427 = vmatpush2.msra.mxu0 0.0
        %428 = vmatprep.subr.mxu0 0.0
        %429 = vmatpush2.msra.mxu0 0.0
        %430 = vmatprep.subr.mxu0 0.0
        %431 = vmatpush2.msra.mxu0 0.0
        %432 = vmatprep.subr.mxu0 0.0
        %433 = vmatpush2.msra.mxu0 0.0
        %434 = vmatprep.subr.mxu0 0.0
        %435 = vmatpush2.msra.mxu0 0.0
        %436 = vmatprep.subr.mxu0 0.0
        %437 = vmatpush2.msra.mxu0 0.0
        %438 = vmatprep.subr.mxu0 0.0
        %439 = vmatpush2.msra.mxu0 0.0
        %440 = vmatprep.subr.mxu0 0.0
        %441 = vmatpush2.msra.mxu0 0.0
        %442 = vmatprep.subr.mxu0 0.0
        %443 = vmatpush2.msra.mxu0 0.0
        %444 = vmatprep.mubr.f32.mxu0 0.0
        %445 = vmatmul.mubr.f32.gmra.mxu0 %v369
        %v446 = vpop.f32.mrf.mxu0
        %v447 = vadd.f32 %v351, %v446
        %v448 = vpop.f32.mrf.mxu0
        %v449 = vadd.f32 %v351, %v448
        %450 = vmatprep.mubr.f32.mxu0 0.0
        %451 = vmatmul.mubr.f32.gmra.mxu0 %v372
        %v452 = vpop.f32.mrf.mxu0
        %v453 = vadd.f32 %v356, %v452
        %v454 = vpop.f32.mrf.mxu0
        %v455 = vadd.f32 %v356, %v454
        %456 = vmatprep.mubr.f32.mxu0 0.0
        %457 = vmatmul.mubr.f32.gmra.mxu0 %v375
        %v458 = vpop.f32.mrf.mxu0
        %v459 = vadd.f32 %v361, %v458
        %v460 = vpop.f32.mrf.mxu0
        %v461 = vadd.f32 %v361, %v460
        %462 = vmatprep.mubr.f32.mxu0 0.0
        %463 = vmatmul.mubr.f32.gmra.mxu0 %v378
        %v464 = vpop.f32.mrf.mxu0
        %v465 = vadd.f32 %v366, %v464
        %v466 = vpop.f32.mrf.mxu0
        %v467 = vadd.f32 %v366, %v466
        %468 = vdwg.mxu0
        %v469 = vmul.f32 %v447, %v447
        %v470 = vmul.f32 %v449, %v449
        %v471 = vmul.f32 %v453, %v453
        %v472 = vmul.f32 %v455, %v455
        %v473 = vmul.f32 %v459, %v459
        %v474 = vmul.f32 %v461, %v461
        %v475 = vmul.f32 %v465, %v465
        %v476 = vmul.f32 %v467, %v467
        %v477 = vadd.f32 %v469, %v471
        %v478 = vadd.f32 %v477, %v473
        %v479 = vadd.f32 %v478, %v475
        %v480 = vrot.slane %v479, 4
        %v481 = vadd.f32 %v479, %v480
        %v482 = vrot.slane %v481, 2
        %v483 = vadd.f32 %v481, %v482
        %v484 = vrot.slane %v483, 1
        %v485 = vadd.f32 %v483, %v484
        %v486 = vadd.f32 %v470, %v472
        %v487 = vadd.f32 %v486, %v474
        %v488 = vadd.f32 %v487, %v476
        %v489 = vrot.slane %v488, 4
        %v490 = vadd.f32 %v488, %v489
        %v491 = vrot.slane %v490, 2
        %v492 = vadd.f32 %v490, %v491
        %v493 = vrot.slane %v492, 1
        %v494 = vadd.f32 %v492, %v493
        %v495 = vmax.f32 %v485, 1e-24
        %v496 = vmax.f32 %v494, 1e-24
        %v497 = vrsqrt.pop %v495
        %v498 = vrsqrt.pop %v496
        %v499 = vmul.f32 %v447, %v497
        %v500 = vmul.f32 %v449, %v498
        %v501 = vmul.f32 %v453, %v497
        %v502 = vmul.f32 %v455, %v498
        %v503 = vmul.f32 %v459, %v497
        %v504 = vmul.f32 %v461, %v498
        %v505 = vmul.f32 %v465, %v497
        %v506 = vmul.f32 %v467, %v498
        %507 = vst [vmem:[%s242] sm:$0xff] %v499
        %508 = vst [vmem:[%s242 + $0x8] sm:$0xff] %v500
        %509 = vst [vmem:[%s242 + $0x10] sm:$0xff] %v501
        %510 = vst [vmem:[%s242 + $0x18] sm:$0xff] %v502
        %511 = vst [vmem:[%s242 + $0x20] sm:$0xff] %v503
        %512 = vst [vmem:[%s242 + $0x28] sm:$0xff] %v504
        %513 = vst [vmem:[%s242 + $0x30] sm:$0xff] %v505
        %514 = vst [vmem:[%s242 + $0x38] sm:$0xff] %v506
        %s515 = sand.u32 %s153, 1
        %s516 = scalar_lea.sflag [#allocation3], %s515
        %s517 = sand.u32 %s153, 1
        %s518 = smul.addr %s517, 64
        %s519 = scalar_lea.vmem [#allocation2], %s518
        // Predicated region
        $region41: #{tpu_custom_call.1} parent=39 // pred_check
          %p520 = pneg %p163
        $region42: #{tpu_custom_call.1} parent=39 // pred_check_branch
          %522 = sbr.rel (%p520) target = $region44
        $region43: #{tpu_custom_call.1} parent=39 // pred_region
          %s523 = smul.u32 2, %s24
          %s525 = ssub.s32 1024, 1024
          %526 = vsyncadd %s516, %s525
          %s527 = smul.addr %s23, 8
          %s528 = sadd.s32 %s523, %s527
          %s529 = smul.addr %s528, 128
          %s530 = scalar_lea.hbm %s5, %s529
          %s531 = sshll.u32 %s519, 4
          %s532 = int_to_ptr.vmem [resolvable:$true] %s531
          %537 = dma.vmem_to_hbm [thread:$0]  %s532, 1024, %s530, %s516, 256, 256, 16
        $region44: #{tpu_custom_call.1} parent=39 // pred_fallthru
          _
      $region40: #{tpu_custom_call.1} parent=5 // pred_fallthru
        _
      %p538 = scmp.le.s32.totalorder 2, %s14
      // Predicated region
      $region45: #{tpu_custom_call.1} parent=5 // pred_check
        %p539 = pneg %p538
      $region46: #{tpu_custom_call.1} parent=5 // pred_check_branch
        %541 = sbr.rel (%p539) target = $region48
      $region47: #{tpu_custom_call.1} parent=5 // pred_region
        %s542 = ssub.s32 %s14, 2
        // Predicated region
        $region49: #{tpu_custom_call.1} parent=47 // pred_check
          %p543 = pneg %p169
        $region50: #{tpu_custom_call.1} parent=47 // pred_check_branch
          %545 = sbr.rel (%p543) target = $region52
        $region51: #{tpu_custom_call.1} parent=47 // pred_region
          %s546 = sand.u32 %s154, 1
          %s547 = scalar_lea.sflag [#allocation3], %s546
          %s548 = sand.u32 %s154, 1
          %s549 = smul.addr %s548, 64
          %s550 = scalar_lea.vmem [#allocation2], %s549
          %551 = dma.done %s547, 1024
        $region52: #{tpu_custom_call.1} parent=47 // pred_fallthru
          _
      $region48: #{tpu_custom_call.1} parent=5 // pred_fallthru
        _
    $region6: #{tpu_custom_call.1} parent=1 // loop_footer
      %s18 = sadd.s32 1, %s14
    $region7: #{tpu_custom_call.1} parent=1 // loop_footer_branch
      %13 = sbr.rel target = $region3
    $region8: #{tpu_custom_call.1} parent=1 // loop_exit
      _
    %552 = vsyncpa [#allocation3], 1
    %s553 = scalar_lea.sflag [#allocation3], 1
    %554 = vsyncpa %s553, 1

</llo_original>
